<compile_context>
chip_gen: v7x
topology: tpu7x:2x2x1
jax: 0.10.0
libtpu: 0.0.40
codegen_flags: <defaults>
</compile_context>

<pallas_src>
import jax
import jax.numpy as jnp
from jax import lax
from jax.experimental import pallas as pl
from jax.experimental.pallas import tpu as pltpu


def _cdiv(a, b):
    return -(-a // b)


# ----------------------------------------------------------------------------- kernel

def rt_engine_kernel(x_ref, wc_ref, bc_ref, pool_ref, wf_ref, bf_ref, o_ref):
    """Fused conv3x3 + bias + ReLU -> global-avg-pool -> fc for one batch block.

    x_ref   : (9*C_in, Bblk*HWp)  bf16  tap-stacked inputs, images stacked on lanes
    wc_ref  : (C_out, 9*C_in)     bf16  conv weights, tap-major over (kh, kw, c_in)
    bc_ref  : (C_out, 1)          f32
    pool_ref: (Bblk*HWp, Bblk)    f32   block-diagonal 1/(H*W) pooling matrix
    wf_ref  : (NC, C_out)         f32
    bf_ref  : (NC, 1)             f32
    o_ref   : (1, NC, Bblk)       f32
    """
    # conv3x3 for all Bblk images as ONE (C_out, 9*C_in) @ (9*C_in, Bblk*HWp) matmul.
    feat = jnp.dot(wc_ref[...], x_ref[...],
                   preferred_element_type=jnp.float32)           # (C_out, Bblk*HWp)
    feat = jnp.maximum(feat + bc_ref[...], 0.0)                  # bias + ReLU

    # global average pool as a matmul; zero rows kill the HW->HWp lane padding and
    # keep each image's columns separate.
    pooled = jnp.dot(feat, pool_ref[...],
                     preferred_element_type=jnp.float32)         # (C_out, Bblk)

    # classifier head.
    logits = jnp.dot(wf_ref[...], pooled,
                     preferred_element_type=jnp.float32) + bf_ref[...]   # (NC, Bblk)
    o_ref[0] = logits


# ----------------------------------------------------------------------------- glue

def _pick_batch_block(B, cap=16):
    """Images per grid step: big enough to amortize per-step overhead, but keep the
    grid >= 2 steps (v7x has 2 TensorCores) whenever B >= 2."""
    if B <= 1:
        return 1, 1
    nblk = max(2, _cdiv(B, cap))
    bblk = _cdiv(B, nblk)
    nblk = _cdiv(B, bblk)
    return bblk, nblk


@jax.jit
def rt_infer_forward(im, params):
    """Equivalent of Rt_Infer.forward(im): run the (synthetic) recognition engine.

    im: float32 NCHW tensor.  fp16 / dynamic-shape branches of the original wrapper
    are hard-coded off in its __init__, so no cast / rebind branch is taken.
    """
    B, C, H, W = im.shape
    w_conv, b_conv, w_fc, b_fc = (params["w_conv"], params["b_conv"],
                                  params["w_fc"], params["b_fc"])
    C_out, num_classes = w_fc.shape
    HW = H * W
    HWp = _cdiv(HW, 128) * 128                      # lane-align each image's columns
    Bblk, nblk = _pick_batch_block(B)
    Bpad = Bblk * nblk

    # --- prologue: stack the 9 conv taps (NCHW is already channels-major) ----------
    x = im.astype(jnp.float32)
    xp = jnp.pad(x, ((0, 0), (0, 0), (1, 1), (1, 1)))            # (B, C, H+2, W+2)
    taps = [xp[:, :, di:di + H, dj:dj + W]
            for di in range(3) for dj in range(3)]               # 9 x (B, C, H, W)
    x9 = jnp.stack(taps, axis=1).reshape(B, 9 * C, HW)           # (B, 36, HW)
    x9 = jnp.pad(x9, ((0, Bpad - B), (0, 0), (0, HWp - HW)))     # batch + lane pad
    x9 = jnp.transpose(x9, (1, 0, 2)).reshape(9 * C, Bpad * HWp)
    x9 = x9.astype(jnp.bfloat16)                                 # MXU operand dtype

    # conv weight (O, I, 3, 3) -> (C_out, 9*C_in), tap-major over (kh, kw, c_in).
    wc = jnp.transpose(w_conv, (0, 2, 3, 1)).reshape(C_out, 9 * C).astype(jnp.bfloat16)
    bc = b_conv.reshape(C_out, 1).astype(jnp.float32)

    # block-diagonal pooling matrix: 1/(H*W) on its own image's valid lanes, else 0.
    valid = (jnp.arange(HWp) < HW).astype(jnp.float32)
    pool = jnp.eye(Bblk, dtype=jnp.float32)[:, None, :] * valid[None, :, None]
    pool = (pool / float(HW)).reshape(Bblk * HWp, Bblk)

    wf = w_fc.T.astype(jnp.float32)                              # (NC, C_out)
    bf = b_fc.reshape(num_classes, 1).astype(jnp.float32)

    out = pl.pallas_call(
        rt_engine_kernel,
        out_shape=jax.ShapeDtypeStruct((nblk, num_classes, Bblk), jnp.float32),
        grid=(nblk,),
        in_specs=[
            pl.BlockSpec((9 * C, Bblk * HWp), lambda i: (0, i)),     # per-step images
            pl.BlockSpec((C_out, 9 * C), lambda i: (0, 0)),          # VMEM-resident
            pl.BlockSpec((C_out, 1), lambda i: (0, 0)),
            pl.BlockSpec((Bblk * HWp, Bblk), lambda i: (0, 0)),
            pl.BlockSpec((num_classes, C_out), lambda i: (0, 0)),
            pl.BlockSpec((num_classes, 1), lambda i: (0, 0)),
        ],
        out_specs=pl.BlockSpec((1, num_classes, Bblk), lambda i: (i, 0, 0)),
        compiler_params=pltpu.CompilerParams(
            dimension_semantics=("parallel",)),                      # v7x: 2 TCs
    )(x9, wc, bc, pool, wf, bf)

    # (nblk, NC, Bblk) -> (Bpad, NC) -> drop batch padding.
    return jnp.transpose(out, (0, 2, 1)).reshape(Bpad, num_classes)[:B]


def make_params(key, c_in=4, c_conv=8, num_classes=10):
    """Deterministic synthetic "engine" weights (stand-in for the TRT plan file)."""
    k1, k2, k3, k4 = jax.random.split(key, 4)
    return {
        "w_conv": jax.random.normal(k1, (c_conv, c_in, 3, 3), jnp.float32) * 0.1,
        "b_conv": jax.random.normal(k2, (c_conv,), jnp.float32) * 0.01,
        "w_fc":   jax.random.normal(k3, (c_conv, num_classes), jnp.float32) * 0.1,
        "b_fc":   jax.random.normal(k4, (num_classes,), jnp.float32) * 0.01,
    }


def rt_infer_reference(im, params):
    """Pure-JAX reference of the synthetic engine (correctness check)."""
    w_conv, b_conv, w_fc, b_fc = (params["w_conv"], params["b_conv"],
                                  params["w_fc"], params["b_fc"])
    y = lax.conv_general_dilated(
        im, w_conv, window_strides=(1, 1), padding="SAME",
        dimension_numbers=("NCHW", "OIHW", "NCHW"),
        precision=lax.Precision.HIGHEST)
    y = jnp.maximum(y + b_conv[None, :, None, None], 0.0)
    pooled = y.mean(axis=(2, 3))
    return jnp.dot(pooled, w_fc, precision=lax.Precision.HIGHEST) + b_fc


# TODO(synk): the real Rt_Infer deserializes an opaque TensorRT plan file and calls
# execute_v2 on raw device pointers; that engine graph cannot be reproduced, so a
# deterministic synthetic recognition network stands in for the engine body above.

if __name__ == "__main__":
    key = jax.random.PRNGKey(0)
    k_x, k_p = jax.random.split(key)

    B, C, H, W = 2, 4, 16, 16
    x = jax.random.normal(k_x, (B, C, H, W), jnp.float32)        # NCHW input binding
    params = make_params(k_p, c_in=C, c_conv=8, num_classes=10)

    y = rt_infer_forward(x, params)
    jax.block_until_ready(y)

    y_ref = rt_infer_reference(x, params)
    assert y.shape == (B, 10) and y.dtype == jnp.float32
    err = float(jnp.max(jnp.abs(y - y_ref)))
    # bf16 MXU operands with f32 accumulation: expected error ~1e-4 at logit scale.
    assert err < 5e-3, f"max abs err {err}"
    print("KERNEL_OK")
</pallas_src>

<mosaic_0001>
module attributes {stable_mosaic.version = 11 : i64} {
  func.func @rt_engine_kernel(%arg0: i32, %arg1: memref<36x256xbf16, #tpu.memory_space<vmem>>, %arg2: memref<8x36xbf16, #tpu.memory_space<vmem>>, %arg3: memref<8x1xf32, #tpu.memory_space<vmem>>, %arg4: memref<256x1xf32, #tpu.memory_space<vmem>>, %arg5: memref<10x8xf32, #tpu.memory_space<vmem>>, %arg6: memref<10x1xf32, #tpu.memory_space<vmem>>, %arg7: memref<1x10x1xf32, #tpu.memory_space<vmem>>) attributes {dimension_semantics = [#tpu.dimension_semantics<parallel>], iteration_bounds = array<i64: 2>, scalar_prefetch = 0 : i64, scratch_operands = 0 : i64, tpu.core_type = #tpu.core_type<tc>, window_params = [{transform_indices = @transform_0, window_bounds = array<i64: 36, 256>}, {pipeline_mode = #tpu.pipeline_mode<synchronous>, transform_indices = @transform_1, window_bounds = array<i64: 8, 36>}, {pipeline_mode = #tpu.pipeline_mode<synchronous>, transform_indices = @transform_2, window_bounds = array<i64: 8, 1>}, {pipeline_mode = #tpu.pipeline_mode<synchronous>, transform_indices = @transform_3, window_bounds = array<i64: 256, 1>}, {pipeline_mode = #tpu.pipeline_mode<synchronous>, transform_indices = @transform_4, window_bounds = array<i64: 10, 8>}, {pipeline_mode = #tpu.pipeline_mode<synchronous>, transform_indices = @transform_5, window_bounds = array<i64: 10, 1>}, {transform_indices = @transform_6, window_bounds = array<i64: 1, 10, 1>}]} {
    %c0 = arith.constant 0 : index
    %c0_0 = arith.constant 0 : index
    %0 = vector.load %arg2[%c0, %c0_0] : memref<8x36xbf16, #tpu.memory_space<vmem>>, vector<8x36xbf16>
    %c0_1 = arith.constant 0 : index
    %c0_2 = arith.constant 0 : index
    %1 = vector.load %arg1[%c0_1, %c0_2] : memref<36x256xbf16, #tpu.memory_space<vmem>>, vector<36x256xbf16>
    %cst = arith.constant dense<0.000000e+00> : vector<8x256xf32>
    %2 = tpu.matmul %0, %1, %cst {dimension_numbers = #tpu.dot_dimension_numbers<[1], [0], [0], [1], [0, 0, 1, 1], [], []>} : vector<8x36xbf16>, vector<36x256xbf16>, vector<8x256xf32> -> vector<8x256xf32>
    %c0_3 = arith.constant 0 : index
    %c0_4 = arith.constant 0 : index
    %3 = vector.load %arg3[%c0_3, %c0_4] : memref<8x1xf32, #tpu.memory_space<vmem>>, vector<8x1xf32>
    %4 = vector.broadcast %3 : vector<8x1xf32> to vector<8x256xf32>
    %5 = arith.addf %2, %4 : vector<8x256xf32>
    %cst_5 = arith.constant 0.000000e+00 : f32
    %6 = vector.broadcast %cst_5 : f32 to vector<8x256xf32>
    %7 = arith.maximumf %5, %6 : vector<8x256xf32>
    %c0_6 = arith.constant 0 : index
    %c0_7 = arith.constant 0 : index
    %8 = vector.load %arg4[%c0_6, %c0_7] : memref<256x1xf32, #tpu.memory_space<vmem>>, vector<256x1xf32>
    %cst_8 = arith.constant dense<0.000000e+00> : vector<8x1xf32>
    %9 = tpu.matmul %7, %8, %cst_8 {dimension_numbers = #tpu.dot_dimension_numbers<[1], [0], [0], [1], [0, 0, 1, 1], [], []>} : vector<8x256xf32>, vector<256x1xf32>, vector<8x1xf32> -> vector<8x1xf32>
    %c0_9 = arith.constant 0 : index
    %c0_10 = arith.constant 0 : index
    %10 = vector.load %arg5[%c0_9, %c0_10] : memref<10x8xf32, #tpu.memory_space<vmem>>, vector<10x8xf32>
    %cst_11 = arith.constant dense<0.000000e+00> : vector<10x1xf32>
    %11 = tpu.matmul %10, %9, %cst_11 {dimension_numbers = #tpu.dot_dimension_numbers<[1], [0], [0], [1], [0, 0, 1, 1], [], []>} : vector<10x8xf32>, vector<8x1xf32>, vector<10x1xf32> -> vector<10x1xf32>
    %c0_12 = arith.constant 0 : index
    %c0_13 = arith.constant 0 : index
    %12 = vector.load %arg6[%c0_12, %c0_13] : memref<10x1xf32, #tpu.memory_space<vmem>>, vector<10x1xf32>
    %13 = arith.addf %11, %12 : vector<10x1xf32>
    %c0_14 = arith.constant 0 : index
    %c0_15 = arith.constant 0 : index
    %c0_16 = arith.constant 0 : index
    %14 = vector.load %arg7[%c0_14, %c0_15, %c0_16] : memref<1x10x1xf32, #tpu.memory_space<vmem>>, vector<1x10x1xf32>
    %15 = vector.shape_cast %14 : vector<1x10x1xf32> to vector<10x1xf32>
    %16 = vector.shape_cast %13 : vector<10x1xf32> to vector<1x10x1xf32>
    tpu.vector_store %arg7[%c0_14, %c0_15, %c0_16], %16 {strides = array<i32>} : memref<1x10x1xf32, #tpu.memory_space<vmem>>, vector<1x10x1xf32>,
    return
  }
  func.func @transform_0(%arg0: i32) -> (i32, i32) {
    %c0_i32 = arith.constant 0 : i32
    %c0_i32_0 = arith.constant 0 : i32
    return %c0_i32, %arg0 : i32, i32
  }
  func.func @transform_1(%arg0: i32) -> (i32, i32) {
    %c0_i32 = arith.constant 0 : i32
    %c0_i32_0 = arith.constant 0 : i32
    %c0_i32_1 = arith.constant 0 : i32
    return %c0_i32, %c0_i32_0 : i32, i32
  }
  func.func @transform_2(%arg0: i32) -> (i32, i32) {
    %c0_i32 = arith.constant 0 : i32
    %c0_i32_0 = arith.constant 0 : i32
    %c0_i32_1 = arith.constant 0 : i32
    return %c0_i32, %c0_i32_0 : i32, i32
  }
  func.func @transform_3(%arg0: i32) -> (i32, i32) {
    %c0_i32 = arith.constant 0 : i32
    %c0_i32_0 = arith.constant 0 : i32
    %c0_i32_1 = arith.constant 0 : i32
    return %c0_i32, %c0_i32_0 : i32, i32
  }
  func.func @transform_4(%arg0: i32) -> (i32, i32) {
    %c0_i32 = arith.constant 0 : i32
    %c0_i32_0 = arith.constant 0 : i32
    %c0_i32_1 = arith.constant 0 : i32
    return %c0_i32, %c0_i32_0 : i32, i32
  }
  func.func @transform_5(%arg0: i32) -> (i32, i32) {
    %c0_i32 = arith.constant 0 : i32
    %c0_i32_0 = arith.constant 0 : i32
    %c0_i32_1 = arith.constant 0 : i32
    return %c0_i32, %c0_i32_0 : i32, i32
  }
  func.func @transform_6(%arg0: i32) -> (i32, i32, i32) {
    %c0_i32 = arith.constant 0 : i32
    %c0_i32_0 = arith.constant 0 : i32
    %c0_i32_1 = arith.constant 0 : i32
    return %arg0, %c0_i32, %c0_i32_0 : i32, i32, i32
  }
}

</mosaic_0001>

<llo_original>
// kernel: rt_infer_forward.1
$region0: #{rt_infer_forward.1}
  #allocation0 [shape = 'u32[]', space=smem, size = 0x4, offset = 0x4, fixed_abs, tag = 'smem constant byte address 0x4 - core index']
  #allocation1 [shape = 'u32[144,128]{1,0:T(1,128)}', space=vmem, size = 0x12000, scoped, tag = 'internal scratch']
  %s0 = inlined_call_operand.vmem [shape: bf16[36,512], index: 0, kind: input, shape index: {}]
  %s1 = inlined_call_operand.vmem [shape: bf16[8,36], index: 1, kind: input, shape index: {}]
  %s2 = inlined_call_operand.vmem [shape: f32[8,1], index: 2, kind: input, shape index: {}]
  %s3 = inlined_call_operand.vmem [shape: f32[256,1], index: 3, kind: input, shape index: {}]
  %s4 = inlined_call_operand.vmem [shape: f32[10,8], index: 4, kind: input, shape index: {}]
  %s5 = inlined_call_operand.vmem [shape: f32[10,1], index: 5, kind: input, shape index: {}]
  %s6 = inlined_call_operand.vmem [shape: f32[2,10,1], index: 6, kind: output, shape index: {}]
  %s7 = sld [smem:[#allocation0]]
  $region95: #{rt_infer_forward.1} parent=0
    _
  %s9 = ssub.s32 1, %s7
  %s10 = scalar_select 0, %s9, %s7
  $region1: #{rt_infer_forward.1} parent=0
    #allocation2 [shape = 'u8[40960]{0}', space=vmem, size = 0xa000, scoped, tag = 'input window, operand 0']
    loop: start=0, step=1, limit=4
    $region2: #{rt_infer_forward.1} parent=1 // loop_pre_header
      _
    $region3: #{rt_infer_forward.1} parent=1 // loop_header
      %s12 = sphi 0, %s16
      %p13 = scmp.ge.s32.totalorder %s12, 4
      %s22 = sphi 0, %s24
      %s25 = sphi 0, %s22
      %s26 = sphi 0, %s25
      %s42 = sphi 0, %s26
      %s46 = sphi 0, %s46
      %s48 = sphi 0, %s46
      %s49 = sphi 0, %s48
      %s63 = sphi 0, %s49
      %s67 = sphi 0, %s67
      %s69 = sphi 0, %s67
      %s70 = sphi 0, %s69
      %s84 = sphi 0, %s70
      %s88 = sphi 0, %s88
      %s90 = sphi 0, %s88
      %s91 = sphi 0, %s90
      %s105 = sphi 0, %s91
      %s109 = sphi 0, %s109
      %s111 = sphi 0, %s109
      %s112 = sphi 0, %s111
      %s126 = sphi 0, %s112
      %s130 = sphi 0, %s130
      %s132 = sphi 0, %s130
      %s133 = sphi 0, %s132
      %s147 = sphi 0, %s133
      %s153 = sphi 0, %s155
      %s156 = sphi 0, %s153
      %s157 = sphi 0, %s156
      %s173 = sphi 0, %s157
    $region4: #{rt_infer_forward.1} parent=1 // loop_header_branch
      %15 = sbr.rel (%p13) target = $region8
    $region5: #{rt_infer_forward.1} parent=1 // loop_body
      %s17 = ssub.s32 %s12, 1
      %s18 = ssub.s32 %s12, 2
      %s19 = sadd.s32 %s12, 1
      %s20 = ssub.s32 %s12, %s19
      %p21 = scmp.eq.s32.totalorder %s20, 0
      %s23 = sadd.s32 %s22, 1
      %s24 = scalar_select %p21, %s22, %s23
      %p27 = pneg %p21
      %p28 = scmp.eq.s32.totalorder %s12, 1
      %p29 = por %p27, %p28
      %p30 = scmp.ne.s32.totalorder %s22, %s25
      %p31 = scmp.eq.s32.totalorder %s12, 0
      %p32 = por %p30, %p31
      %p33 = scmp.ne.s32.totalorder %s22, %s25
      %p34 = scmp.eq.s32.totalorder %s17, 1
      %p35 = por %p33, %p34
      %p36 = scmp.ne.s32.totalorder %s25, %s26
      %p37 = scmp.eq.s32.totalorder %s17, 0
      %p38 = por %p36, %p37
      %p39 = scmp.ne.s32.totalorder %s25, %s26
      %p40 = scmp.eq.s32.totalorder %s18, 1
      %p41 = por %p39, %p40
      %p43 = scmp.ne.s32.totalorder %s26, %s42
      %p44 = scmp.eq.s32.totalorder %s18, 0
      %p45 = por %p43, %p44
      %s47 = sadd.s32 %s46, 1
      %p50 = scmp.eq.s32.totalorder %s12, 1
      %p51 = scmp.ne.s32.totalorder %s46, %s48
      %p52 = scmp.eq.s32.totalorder %s12, 0
      %p53 = por %p51, %p52
      %p54 = scmp.ne.s32.totalorder %s46, %s48
      %p55 = scmp.eq.s32.totalorder %s17, 1
      %p56 = por %p54, %p55
      %p57 = scmp.ne.s32.totalorder %s48, %s49
      %p58 = scmp.eq.s32.totalorder %s17, 0
      %p59 = por %p57, %p58
      %p60 = scmp.ne.s32.totalorder %s48, %s49
      %p61 = scmp.eq.s32.totalorder %s18, 1
      %p62 = por %p60, %p61
      %p64 = scmp.ne.s32.totalorder %s49, %s63
      %p65 = scmp.eq.s32.totalorder %s18, 0
      %p66 = por %p64, %p65
      %s68 = sadd.s32 %s67, 1
      %p71 = scmp.eq.s32.totalorder %s12, 1
      %p72 = scmp.ne.s32.totalorder %s67, %s69
      %p73 = scmp.eq.s32.totalorder %s12, 0
      %p74 = por %p72, %p73
      %p75 = scmp.ne.s32.totalorder %s67, %s69
      %p76 = scmp.eq.s32.totalorder %s17, 1
      %p77 = por %p75, %p76
      %p78 = scmp.ne.s32.totalorder %s69, %s70
      %p79 = scmp.eq.s32.totalorder %s17, 0
      %p80 = por %p78, %p79
      %p81 = scmp.ne.s32.totalorder %s69, %s70
      %p82 = scmp.eq.s32.totalorder %s18, 1
      %p83 = por %p81, %p82
      %p85 = scmp.ne.s32.totalorder %s70, %s84
      %p86 = scmp.eq.s32.totalorder %s18, 0
      %p87 = por %p85, %p86
      %s89 = sadd.s32 %s88, 1
      %p92 = scmp.eq.s32.totalorder %s12, 1
      %p93 = scmp.ne.s32.totalorder %s88, %s90
      %p94 = scmp.eq.s32.totalorder %s12, 0
      %p95 = por %p93, %p94
      %p96 = scmp.ne.s32.totalorder %s88, %s90
      %p97 = scmp.eq.s32.totalorder %s17, 1
      %p98 = por %p96, %p97
      %p99 = scmp.ne.s32.totalorder %s90, %s91
      %p100 = scmp.eq.s32.totalorder %s17, 0
      %p101 = por %p99, %p100
      %p102 = scmp.ne.s32.totalorder %s90, %s91
      %p103 = scmp.eq.s32.totalorder %s18, 1
      %p104 = por %p102, %p103
      %p106 = scmp.ne.s32.totalorder %s91, %s105
      %p107 = scmp.eq.s32.totalorder %s18, 0
      %p108 = por %p106, %p107
      %s110 = sadd.s32 %s109, 1
      %p113 = scmp.eq.s32.totalorder %s12, 1
      %p114 = scmp.ne.s32.totalorder %s109, %s111
      %p115 = scmp.eq.s32.totalorder %s12, 0
      %p116 = por %p114, %p115
      %p117 = scmp.ne.s32.totalorder %s109, %s111
      %p118 = scmp.eq.s32.totalorder %s17, 1
      %p119 = por %p117, %p118
      %p120 = scmp.ne.s32.totalorder %s111, %s112
      %p121 = scmp.eq.s32.totalorder %s17, 0
      %p122 = por %p120, %p121
      %p123 = scmp.ne.s32.totalorder %s111, %s112
      %p124 = scmp.eq.s32.totalorder %s18, 1
      %p125 = por %p123, %p124
      %p127 = scmp.ne.s32.totalorder %s112, %s126
      %p128 = scmp.eq.s32.totalorder %s18, 0
      %p129 = por %p127, %p128
      %s131 = sadd.s32 %s130, 1
      %p134 = scmp.eq.s32.totalorder %s12, 1
      %p135 = scmp.ne.s32.totalorder %s130, %s132
      %p136 = scmp.eq.s32.totalorder %s12, 0
      %p137 = por %p135, %p136
      %p138 = scmp.ne.s32.totalorder %s130, %s132
      %p139 = scmp.eq.s32.totalorder %s17, 1
      %p140 = por %p138, %p139
      %p141 = scmp.ne.s32.totalorder %s132, %s133
      %p142 = scmp.eq.s32.totalorder %s17, 0
      %p143 = por %p141, %p142
      %p144 = scmp.ne.s32.totalorder %s132, %s133
      %p145 = scmp.eq.s32.totalorder %s18, 1
      %p146 = por %p144, %p145
      %p148 = scmp.ne.s32.totalorder %s133, %s147
      %p149 = scmp.eq.s32.totalorder %s18, 0
      %p150 = por %p148, %p149
      %s151 = ssub.s32 %s12, %s19
      %p152 = scmp.eq.s32.totalorder %s151, 0
      %s154 = sadd.s32 %s153, 1
      %s155 = scalar_select %p152, %s153, %s154
      %p158 = pneg %p152
      %p159 = scmp.eq.s32.totalorder %s12, 1
      %p160 = por %p158, %p159
      %p161 = scmp.ne.s32.totalorder %s153, %s156
      %p162 = scmp.eq.s32.totalorder %s12, 0
      %p163 = por %p161, %p162
      %p164 = scmp.ne.s32.totalorder %s153, %s156
      %p165 = scmp.eq.s32.totalorder %s17, 1
      %p166 = por %p164, %p165
      %p167 = scmp.ne.s32.totalorder %s156, %s157
      %p168 = scmp.eq.s32.totalorder %s17, 0
      %p169 = por %p167, %p168
      %p170 = scmp.ne.s32.totalorder %s156, %s157
      %p171 = scmp.eq.s32.totalorder %s18, 1
      %p172 = por %p170, %p171
      %p174 = scmp.ne.s32.totalorder %s157, %s173
      %p175 = scmp.eq.s32.totalorder %s18, 0
      %p176 = por %p174, %p175
      %p177 = scmp.le.s32.totalorder 1, %s12
      %p178 = scmp.lt.s32.totalorder %s12, 3
      %p179 = pnand %p177, %p178
      %p180 = pneg %p179
      // Predicated region
      $region9: #{rt_infer_forward.1} parent=5 // pred_check
        _
      $region10: #{rt_infer_forward.1} parent=5 // pred_check_branch
        %182 = sbr.rel (%p179) target = $region12
      $region11: #{rt_infer_forward.1} parent=5 // pred_region
        %s183 = ssub.s32 %s12, 1
        // Predicated region
        $region13: #{rt_infer_forward.1} parent=11 // pred_check
          %p184 = pneg %p59
        $region14: #{rt_infer_forward.1} parent=11 // pred_check_branch
          %186 = sbr.rel (%p184) target = $region16
        $region15: #{rt_infer_forward.1} parent=11 // pred_region
          _
        $region16: #{rt_infer_forward.1} parent=11 // pred_fallthru
          _
        // Predicated region
        $region17: #{rt_infer_forward.1} parent=11 // pred_check
          %p187 = pneg %p80
        $region18: #{rt_infer_forward.1} parent=11 // pred_check_branch
          %189 = sbr.rel (%p187) target = $region20
        $region19: #{rt_infer_forward.1} parent=11 // pred_region
          _
        $region20: #{rt_infer_forward.1} parent=11 // pred_fallthru
          _
        // Predicated region
        $region21: #{rt_infer_forward.1} parent=11 // pred_check
          %p190 = pneg %p101
        $region22: #{rt_infer_forward.1} parent=11 // pred_check_branch
          %192 = sbr.rel (%p190) target = $region24
        $region23: #{rt_infer_forward.1} parent=11 // pred_region
          _
        $region24: #{rt_infer_forward.1} parent=11 // pred_fallthru
          _
        // Predicated region
        $region25: #{rt_infer_forward.1} parent=11 // pred_check
          %p193 = pneg %p122
        $region26: #{rt_infer_forward.1} parent=11 // pred_check_branch
          %195 = sbr.rel (%p193) target = $region28
        $region27: #{rt_infer_forward.1} parent=11 // pred_region
          _
        $region28: #{rt_infer_forward.1} parent=11 // pred_fallthru
          _
        // Predicated region
        $region29: #{rt_infer_forward.1} parent=11 // pred_check
          %p196 = pneg %p143
        $region30: #{rt_infer_forward.1} parent=11 // pred_check_branch
          %198 = sbr.rel (%p196) target = $region32
        $region31: #{rt_infer_forward.1} parent=11 // pred_region
          _
        $region32: #{rt_infer_forward.1} parent=11 // pred_fallthru
          _
      $region12: #{rt_infer_forward.1} parent=5 // pred_fallthru
        _
      %p199 = scmp.lt.s32.totalorder %s12, 2
      // Predicated region
      $region33: #{rt_infer_forward.1} parent=5 // pred_check
        %p200 = pneg %p199
      $region34: #{rt_infer_forward.1} parent=5 // pred_check_branch
        %202 = sbr.rel (%p200) target = $region36
      $region35: #{rt_infer_forward.1} parent=5 // pred_region
        // Predicated region
        $region37: #{rt_infer_forward.1} parent=35 // pred_check
          %p203 = pneg %p32
        $region38: #{rt_infer_forward.1} parent=35 // pred_check_branch
          %205 = sbr.rel (%p203) target = $region40
        $region39: #{rt_infer_forward.1} parent=35 // pred_region
          %s206 = sand.u32 %s22, 1
          %s207 = sand.u32 %s22, 1
          %s208 = smul.addr %s207, 40
          %s209 = scalar_lea.vmem [#allocation2], %s208
          %s210 = smul.u32 2, %s12
          %s211 = smul.addr %s210, 4
          %s212 = scalar_lea.vmem %s0, %s211
          // Predicated region
          $region41: #{rt_infer_forward.1} parent=39 // pred_check
            _
          $region42: #{rt_infer_forward.1} parent=39 // pred_check_branch
            %214 = sbr.rel (0) target = $region44
          $region43: #{rt_infer_forward.1} parent=39 // pred_region
            // Predicated region
            $region45: #{rt_infer_forward.1} parent=43 // pred_check
              _
            $region46: #{rt_infer_forward.1} parent=43 // pred_check_branch
              %216 = sbr.rel (0) target = $region48
            $region47: #{rt_infer_forward.1} parent=43 // pred_region
              // Predicated region
              $region60: #{rt_infer_forward.1} parent=47 // pred_check
                _
              $region61: #{rt_infer_forward.1} parent=47 // pred_check_branch
                %239 = sbr.rel (0) target = $region63
              $region62: #{rt_infer_forward.1} parent=47 // pred_region
                loop: start=0, step=1, limit=1
                $region64: #{rt_infer_forward.1} parent=62 // loop_pre_header
                  _
                $region65: #{rt_infer_forward.1} parent=62 // loop_header
                  %s241 = sphi 0, %s245
                  %p242 = scmp.ge.s32.totalorder %s241, 1
                  %s246 = sphi %s212, %s212
                  %s247 = sphi %s209, %s209
                $region66: #{rt_infer_forward.1} parent=62 // loop_header_branch
                  %244 = sbr.rel (%p242) target = $region70
                $region67: #{rt_infer_forward.1} parent=62 // loop_body
                  %v248 = vld [vmem:[%s246] sm:$0xff]
                  %249 = vst [vmem:[%s247] sm:$0xff] %v248
                  %v250 = vld [vmem:[%s246 + $0x10] sm:$0xff]
                  %251 = vst [vmem:[%s247 + $0x8] sm:$0xff] %v250
                  %v252 = vld [vmem:[%s246 + $0x20] sm:$0xff]
                  %253 = vst [vmem:[%s247 + $0x10] sm:$0xff] %v252
                  %v254 = vld [vmem:[%s246 + $0x30] sm:$0xff]
                  %255 = vst [vmem:[%s247 + $0x18] sm:$0xff] %v254
                  %v256 = vld [vmem:[%s246 + $0x40] sm:$0xff]
                  %257 = vst [vmem:[%s247 + $0x20] sm:$0xff] %v256
                $region68: #{rt_infer_forward.1} parent=62 // loop_footer
                  %s245 = sadd.s32 1, %s241
                $region69: #{rt_infer_forward.1} parent=62 // loop_footer_branch
                  %240 = sbr.rel target = $region65
                $region70: #{rt_infer_forward.1} parent=62 // loop_exit
                  _
              $region63: #{rt_infer_forward.1} parent=47 // pred_fallthru
                _
              // Predicated region
              $region71: #{rt_infer_forward.1} parent=47 // pred_check
                _
              $region72: #{rt_infer_forward.1} parent=47 // pred_check_branch
                %259 = sbr.rel target = $region74
              $region73: #{rt_infer_forward.1} parent=47 // pred_region
                _
              $region74: #{rt_infer_forward.1} parent=47 // pred_fallthru
                _
            $region48: #{rt_infer_forward.1} parent=43 // pred_fallthru
              _
            // Predicated region
            $region49: #{rt_infer_forward.1} parent=43 // pred_check
              _
            $region50: #{rt_infer_forward.1} parent=43 // pred_check_branch
              %218 = sbr.rel target = $region52
            $region51: #{rt_infer_forward.1} parent=43 // pred_region
              loop: start=0, step=1, limit=1
              $region53: #{rt_infer_forward.1} parent=51 // loop_pre_header
                _
              $region54: #{rt_infer_forward.1} parent=51 // loop_header
                %s221 = sphi 0, %s225
                %p222 = scmp.ge.s32.totalorder %s221, 1
                %s226 = sphi %s212, %s212
                %s227 = sphi %s209, %s209
              $region55: #{rt_infer_forward.1} parent=51 // loop_header_branch
                %224 = sbr.rel (%p222) target = $region59
              $region56: #{rt_infer_forward.1} parent=51 // loop_body
                %v228 = vld [vmem:[%s226] sm:$0xff]
                %229 = vst [vmem:[%s227] sm:$0xff] %v228
                %v230 = vld [vmem:[%s226 + $0x10] sm:$0xff]
                %231 = vst [vmem:[%s227 + $0x8] sm:$0xff] %v230
                %v232 = vld [vmem:[%s226 + $0x20] sm:$0xff]
                %233 = vst [vmem:[%s227 + $0x10] sm:$0xff] %v232
                %v234 = vld [vmem:[%s226 + $0x30] sm:$0xff]
                %235 = vst [vmem:[%s227 + $0x18] sm:$0xff] %v234
                %v236 = vld [vmem:[%s226 + $0x40] sm:$0xff]
                %237 = vst [vmem:[%s227 + $0x20] sm:$0xff] %v236
              $region57: #{rt_infer_forward.1} parent=51 // loop_footer
                %s225 = sadd.s32 1, %s221
              $region58: #{rt_infer_forward.1} parent=51 // loop_footer_branch
                %220 = sbr.rel target = $region54
              $region59: #{rt_infer_forward.1} parent=51 // loop_exit
                _
            $region52: #{rt_infer_forward.1} parent=43 // pred_fallthru
              _
          $region44: #{rt_infer_forward.1} parent=39 // pred_fallthru
            _
          %260 = vnop
        $region40: #{rt_infer_forward.1} parent=35 // pred_fallthru
          _
      $region36: #{rt_infer_forward.1} parent=5 // pred_fallthru
        _
      %p261 = scmp.le.s32.totalorder 1, %s12
      %p262 = scmp.lt.s32.totalorder %s12, 3
      %p263 = pnand %p261, %p262
      %p264 = pneg %p263
      // Predicated region
      $region75: #{rt_infer_forward.1} parent=5 // pred_check
        _
      $region76: #{rt_infer_forward.1} parent=5 // pred_check_branch
        %266 = sbr.rel (%p263) target = $region78
      $region77: #{rt_infer_forward.1} parent=5 // pred_region
        %s267 = ssub.s32 %s12, 1
        %s268 = sand.u32 %s25, 1
        %s269 = sand.u32 %s25, 1
        %s270 = smul.addr %s269, 40
        %s271 = scalar_lea.vmem [#allocation2], %s270
        // Predicated region
        $region79: #{rt_infer_forward.1} parent=77 // pred_check
          %p272 = pneg %p38
        $region80: #{rt_infer_forward.1} parent=77 // pred_check_branch
          %274 = sbr.rel (%p272) target = $region82
        $region81: #{rt_infer_forward.1} parent=77 // pred_region
          _
        $region82: #{rt_infer_forward.1} parent=77 // pred_fallthru
          _
        %s275 = sand.u32 %s25, 1
        %s276 = sand.u32 %s25, 1
        %s277 = smul.addr %s276, 40
        %s278 = scalar_lea.vmem [#allocation2], %s277
        %p279 = pneg %p38
        %p280 = pneg %p35
        %p281 = pneg %p59
        %p282 = pneg %p56
        %p283 = pneg %p80
        %p284 = pneg %p77
        %p285 = pneg %p101
        %p286 = pneg %p98
        %p287 = pneg %p122
        %p288 = pneg %p119
        %p289 = pneg %p143
        %p290 = pneg %p140
        %p291 = pneg %p169
        %p292 = pneg %p166
        %p293 = scmp.lt.s32.totalorder %s17, 1
        %s294 = scalar_select %p293, %s17, 1
        %s295 = smul.addr %s294, 2
        %s296 = smul.addr %s295, 8
        %s297 = scalar_lea.vmem %s6, %s296
        %s298 = smul.u32 2, %s17
        %p299 = scmp.lt.s32.totalorder %s17, 1
        %s300 = scalar_select %p299, %s17, 1
        %s301 = smul.addr %s300, 2
        %s302 = smul.addr %s301, 8
        %s303 = scalar_lea.vmem %s6, %s302
        %v305 = vld [vmem:[%s1] sm:$0xf]
        %v306 = vld [vmem:[%s271] sm:$0xff]
        %v307 = vld [vmem:[%s271 + $0x8] sm:$0xff]
        %v308 = vld [vmem:[%s271 + $0x10] sm:$0xff]
        %v309 = vld [vmem:[%s271 + $0x18] sm:$0xff]
        %v310 = vld [vmem:[%s271 + $0x20] sm:$0x33]
        %v311 = vld [vmem:[%s2] sm:$0xff]
        %313 = vset.pattern.permute.xlu0 0
        %314 = vperm.xlu0 %313, %v311
        %v315 = vpop.permute.xlu0 %314
        %v322 = vunpack.c.l.b16 %v306
        %v323 = vunpack.c.h.b16 %v306
        %v324 = vunpack.c.l.b16 %v307
        %v325 = vunpack.c.h.b16 %v307
        %v326 = vunpack.c.l.b16 %v308
        %v327 = vunpack.c.h.b16 %v308
        %v328 = vunpack.c.l.b16 %v309
        %v329 = vunpack.c.h.b16 %v309
        %v330 = vunpack.c.l.b16 %v310
        %v331 = vunpack.c.h.b16 %v310
        %v332 = vpack.c.b16 %v324, %v322
        %v333 = vpack.c.b16 %v325, %v323
        %v334 = vpack.c.b16 %v328, %v326
        %v335 = vpack.c.b16 %v329, %v327
        %v336 = vpack.c.b16 %v330, %v330
        %v337 = vpack.c.b16 %v331, %v331
        %vm342 = vcmask 293888
        %v344 = vsel %vm342, %v305, 0
        %vm346 = vcmask 1041408
        %v348 = vsel %vm346, %v336, 0
        %v351 = vsel %vm346, %v337, 0
        %353 = vmatprep.subr.bf16.mxu0 %v333
        %354 = vmatpush1.bf16.msra.mxu0 %v332
        %355 = vmatprep.subr.bf16.mxu0 %v335
        %356 = vmatpush1.bf16.msra.mxu0 %v334
        %357 = vmatprep.subr.bf16.mxu0 %v351
        %358 = vmatpush1.bf16.msra.mxu0 %v348
        %359 = vmatprep.subr.bf16.mxu0 0
        %360 = vmatpush1.bf16.msra.mxu0 0
        %361 = vmatprep.subr.bf16.mxu0 0
        %362 = vmatpush1.bf16.msra.mxu0 0
        %363 = vmatprep.subr.bf16.mxu0 0
        %364 = vmatpush1.bf16.msra.mxu0 0
        %365 = vmatprep.subr.bf16.mxu0 0
        %366 = vmatpush1.bf16.msra.mxu0 0
        %367 = vmatprep.subr.bf16.mxu0 0
        %368 = vmatpush1.bf16.msra.mxu0 0
        %369 = vmatprep.subr.bf16.mxu0 0
        %370 = vmatpush1.bf16.msra.mxu0 0
        %371 = vmatprep.subr.bf16.mxu0 0
        %372 = vmatpush1.bf16.msra.mxu0 0
        %373 = vmatprep.subr.bf16.mxu0 0
        %374 = vmatpush1.bf16.msra.mxu0 0
        %375 = vmatprep.subr.bf16.mxu0 0
        %376 = vmatpush1.bf16.msra.mxu0 0
        %377 = vmatprep.subr.bf16.mxu0 0
        %378 = vmatpush1.bf16.msra.mxu0 0
        %379 = vmatprep.subr.bf16.mxu0 0
        %380 = vmatpush1.bf16.msra.mxu0 0
        %381 = vmatprep.subr.bf16.mxu0 0
        %382 = vmatpush1.bf16.msra.mxu0 0
        %383 = vmatprep.subr.bf16.mxu0 0
        %384 = vmatpush1.bf16.msra.mxu0 0
        %385 = vmatprep.mubr.bf16.mxu0 0
        %386 = vmatmul.mubr.bf16.gmra.mrb[0].mxu0 %v344
        %v387 = vpop.f32.mrb[0].mxu0
        %v388 = vadd.f32 %v315, %v387
        %v389 = vpop.f32.mrb[0].mxu0
        %v390 = vadd.f32 %v315, %v389
        %v391 = vpop.f32.mrb[0].mxu0
        %v392 = vpop.f32.mrb[0].mxu0
        %393 = vdwg.mxu0
        %v394 = vmax.f32 %v388, 0.0
        %v395 = vmax.f32 %v390, 0.0
        %v396 = vld [vmem:[%s3] sm:$0xff]
        %v397 = vld [vmem:[%s3 + $0x8] sm:$0xff]
        %v398 = vld [vmem:[%s3 + $0x10] sm:$0xff]
        %v399 = vld [vmem:[%s3 + $0x18] sm:$0xff]
        %v400 = vld [vmem:[%s3 + $0x20] sm:$0xff]
        %v401 = vld [vmem:[%s3 + $0x28] sm:$0xff]
        %v402 = vld [vmem:[%s3 + $0x30] sm:$0xff]
        %v403 = vld [vmem:[%s3 + $0x38] sm:$0xff]
        %v404 = vld [vmem:[%s3 + $0x40] sm:$0xff]
        %v405 = vld [vmem:[%s3 + $0x48] sm:$0xff]
        %v406 = vld [vmem:[%s3 + $0x50] sm:$0xff]
        %v407 = vld [vmem:[%s3 + $0x58] sm:$0xff]
        %v408 = vld [vmem:[%s3 + $0x60] sm:$0xff]
        %v409 = vld [vmem:[%s3 + $0x68] sm:$0xff]
        %v410 = vld [vmem:[%s3 + $0x70] sm:$0xff]
        %v411 = vld [vmem:[%s3 + $0x78] sm:$0xff]
        %v412 = vld [vmem:[%s3 + $0x80] sm:$0xff]
        %v413 = vld [vmem:[%s3 + $0x88] sm:$0xff]
        %v414 = vld [vmem:[%s3 + $0x90] sm:$0xff]
        %v415 = vld [vmem:[%s3 + $0x98] sm:$0xff]
        %v416 = vld [vmem:[%s3 + $0xa0] sm:$0xff]
        %v417 = vld [vmem:[%s3 + $0xa8] sm:$0xff]
        %v418 = vld [vmem:[%s3 + $0xb0] sm:$0xff]
        %v419 = vld [vmem:[%s3 + $0xb8] sm:$0xff]
        %v420 = vld [vmem:[%s3 + $0xc0] sm:$0xff]
        %v421 = vld [vmem:[%s3 + $0xc8] sm:$0xff]
        %v422 = vld [vmem:[%s3 + $0xd0] sm:$0xff]
        %v423 = vld [vmem:[%s3 + $0xd8] sm:$0xff]
        %v424 = vld [vmem:[%s3 + $0xe0] sm:$0xff]
        %v425 = vld [vmem:[%s3 + $0xe8] sm:$0xff]
        %v426 = vld [vmem:[%s3 + $0xf0] sm:$0xff]
        %v427 = vld [vmem:[%s3 + $0xf8] sm:$0xff]
        %428 = vmatprep.subr.mxu0 0.0
        %429 = vmatpush1.msra.mxu0 %v396
        %430 = vmatprep.subr.mxu0 0.0
        %431 = vmatpush1.msra.mxu0 %v397
        %432 = vmatprep.subr.mxu0 0.0
        %433 = vmatpush1.msra.mxu0 %v398
        %434 = vmatprep.subr.mxu0 0.0
        %435 = vmatpush1.msra.mxu0 %v399
        %436 = vmatprep.subr.mxu0 0.0
        %437 = vmatpush1.msra.mxu0 %v400
        %438 = vmatprep.subr.mxu0 0.0
        %439 = vmatpush1.msra.mxu0 %v401
        %440 = vmatprep.subr.mxu0 0.0
        %441 = vmatpush1.msra.mxu0 %v402
        %442 = vmatprep.subr.mxu0 0.0
        %443 = vmatpush1.msra.mxu0 %v403
        %444 = vmatprep.subr.mxu0 0.0
        %445 = vmatpush1.msra.mxu0 %v404
        %446 = vmatprep.subr.mxu0 0.0
        %447 = vmatpush1.msra.mxu0 %v405
        %448 = vmatprep.subr.mxu0 0.0
        %449 = vmatpush1.msra.mxu0 %v406
        %450 = vmatprep.subr.mxu0 0.0
        %451 = vmatpush1.msra.mxu0 %v407
        %452 = vmatprep.subr.mxu0 0.0
        %453 = vmatpush1.msra.mxu0 %v408
        %454 = vmatprep.subr.mxu0 0.0
        %455 = vmatpush1.msra.mxu0 %v409
        %456 = vmatprep.subr.mxu0 0.0
        %457 = vmatpush1.msra.mxu0 %v410
        %458 = vmatprep.subr.mxu0 0.0
        %459 = vmatpush1.msra.mxu0 %v411
        %460 = vmatprep.subr.mxu0 0.0
        %461 = vmatpush1.msra.mxu0 %v412
        %462 = vmatprep.subr.mxu0 0.0
        %463 = vmatpush1.msra.mxu0 %v413
        %464 = vmatprep.subr.mxu0 0.0
        %465 = vmatpush1.msra.mxu0 %v414
        %466 = vmatprep.subr.mxu0 0.0
        %467 = vmatpush1.msra.mxu0 %v415
        %468 = vmatprep.subr.mxu0 0.0
        %469 = vmatpush1.msra.mxu0 %v416
        %470 = vmatprep.subr.mxu0 0.0
        %471 = vmatpush1.msra.mxu0 %v417
        %472 = vmatprep.subr.mxu0 0.0
        %473 = vmatpush1.msra.mxu0 %v418
        %474 = vmatprep.subr.mxu0 0.0
        %475 = vmatpush1.msra.mxu0 %v419
        %476 = vmatprep.subr.mxu0 0.0
        %477 = vmatpush1.msra.mxu0 %v420
        %478 = vmatprep.subr.mxu0 0.0
        %479 = vmatpush1.msra.mxu0 %v421
        %480 = vmatprep.subr.mxu0 0.0
        %481 = vmatpush1.msra.mxu0 %v422
        %482 = vmatprep.subr.mxu0 0.0
        %483 = vmatpush1.msra.mxu0 %v423
        %484 = vmatprep.subr.mxu0 0.0
        %485 = vmatpush1.msra.mxu0 %v424
        %486 = vmatprep.subr.mxu0 0.0
        %487 = vmatpush1.msra.mxu0 %v425
        %488 = vmatprep.subr.mxu0 0.0
        %489 = vmatpush1.msra.mxu0 %v426
        %490 = vmatprep.subr.mxu0 0.0
        %491 = vmatpush1.msra.mxu0 %v427
        %492 = vmatprep.mubr.f32.mxu0 %v395
        %493 = vmatmul.mubr.f32.gmra.mrb[0].mxu0 %v394
        %v494 = vpop.f32.mrb[0].mxu0
        %v495 = vadd.f32 0.0, %v494
        %v496 = vpop.f32.mrb[0].mxu0
        %497 = vdwg.mxu0
        %v498 = vld [vmem:[%s4] sm:$0xff]
        %v499 = vld [vmem:[%s4 + $0x8] sm:$0x3]
        %v500 = vld [vmem:[%s5] sm:$0xff]
        %v501 = vld [vmem:[%s5 + $0x8] sm:$0x3]
        %vm502 = vcmask 64512
        %v504 = vsel %vm502, %v498, 0
        %v507 = vsel %vm502, %v499, 0
        %509 = vmatprep.subr.mxu0 0.0
        %510 = vmatpush1.msra.mxu0 %v495
        %511 = vmatprep.subr.mxu0 0.0
        %512 = vmatpush1.msra.mxu0 0.0
        %513 = vmatprep.subr.mxu0 0.0
        %514 = vmatpush1.msra.mxu0 0.0
        %515 = vmatprep.subr.mxu0 0.0
        %516 = vmatpush1.msra.mxu0 0.0
        %517 = vmatprep.subr.mxu0 0.0
        %518 = vmatpush1.msra.mxu0 0.0
        %519 = vmatprep.subr.mxu0 0.0
        %520 = vmatpush1.msra.mxu0 0.0
        %521 = vmatprep.subr.mxu0 0.0
        %522 = vmatpush1.msra.mxu0 0.0
        %523 = vmatprep.subr.mxu0 0.0
        %524 = vmatpush1.msra.mxu0 0.0
        %525 = vmatprep.subr.mxu0 0.0
        %526 = vmatpush1.msra.mxu0 0.0
        %527 = vmatprep.subr.mxu0 0.0
        %528 = vmatpush1.msra.mxu0 0.0
        %529 = vmatprep.subr.mxu0 0.0
        %530 = vmatpush1.msra.mxu0 0.0
        %531 = vmatprep.subr.mxu0 0.0
        %532 = vmatpush1.msra.mxu0 0.0
        %533 = vmatprep.subr.mxu0 0.0
        %534 = vmatpush1.msra.mxu0 0.0
        %535 = vmatprep.subr.mxu0 0.0
        %536 = vmatpush1.msra.mxu0 0.0
        %537 = vmatprep.subr.mxu0 0.0
        %538 = vmatpush1.msra.mxu0 0.0
        %539 = vmatprep.subr.mxu0 0.0
        %540 = vmatpush1.msra.mxu0 0.0
        %541 = vmatprep.subr.mxu0 0.0
        %542 = vmatpush1.msra.mxu0 0.0
        %543 = vmatprep.subr.mxu0 0.0
        %544 = vmatpush1.msra.mxu0 0.0
        %545 = vmatprep.subr.mxu0 0.0
        %546 = vmatpush1.msra.mxu0 0.0
        %547 = vmatprep.subr.mxu0 0.0
        %548 = vmatpush1.msra.mxu0 0.0
        %549 = vmatprep.subr.mxu0 0.0
        %550 = vmatpush1.msra.mxu0 0.0
        %551 = vmatprep.subr.mxu0 0.0
        %552 = vmatpush1.msra.mxu0 0.0
        %553 = vmatprep.subr.mxu0 0.0
        %554 = vmatpush1.msra.mxu0 0.0
        %555 = vmatprep.subr.mxu0 0.0
        %556 = vmatpush1.msra.mxu0 0.0
        %557 = vmatprep.subr.mxu0 0.0
        %558 = vmatpush1.msra.mxu0 0.0
        %559 = vmatprep.subr.mxu0 0.0
        %560 = vmatpush1.msra.mxu0 0.0
        %561 = vmatprep.subr.mxu0 0.0
        %562 = vmatpush1.msra.mxu0 0.0
        %563 = vmatprep.subr.mxu0 0.0
        %564 = vmatpush1.msra.mxu0 0.0
        %565 = vmatprep.subr.mxu0 0.0
        %566 = vmatpush1.msra.mxu0 0.0
        %567 = vmatprep.subr.mxu0 0.0
        %568 = vmatpush1.msra.mxu0 0.0
        %569 = vmatprep.subr.mxu0 0.0
        %570 = vmatpush1.msra.mxu0 0.0
        %571 = vmatprep.subr.mxu0 0.0
        %572 = vmatpush1.msra.mxu0 0.0
        %573 = vmatprep.mubr.f32.mxu0 0.0
        %574 = vmatmul.mubr.f32.gmra.mrb[0].mxu0 %v504
        %v575 = vpop.f32.mrb[0].mxu0
        %v576 = vadd.f32 %v500, %v575
        %v577 = vpop.f32.mrb[0].mxu0
        %578 = vmatprep.mubr.f32.mxu0 0.0
        %579 = vmatmul.mubr.f32.gmra.mrb[0].mxu0 %v507
        %v580 = vpop.f32.mrb[0].mxu0
        %v581 = vadd.f32 %v501, %v580
        %v582 = vpop.f32.mrb[0].mxu0
        %583 = vdwg.mxu0
        %vm584 = vcmask 7168
        %585 = vst.msk [vmem:[%s303] sm:$0xff] %vm584, %v576
        %vm586 = vcmask 1024
        %587 = vst.msk [vmem:[%s303 + $0x8] sm:$0x3] %vm586, %v581
        %p588 = scmp.lt.s32.totalorder %s17, 1
        %s589 = scalar_select %p588, %s17, 1
        %s590 = smul.addr %s589, 2
        %s591 = smul.addr %s590, 8
        %s592 = scalar_lea.vmem %s6, %s591
        // Predicated region
        $region83: #{rt_infer_forward.1} parent=77 // pred_check
          %p593 = pneg %p166
        $region84: #{rt_infer_forward.1} parent=77 // pred_check_branch
          %595 = sbr.rel (%p593) target = $region86
        $region85: #{rt_infer_forward.1} parent=77 // pred_region
          _
        $region86: #{rt_infer_forward.1} parent=77 // pred_fallthru
          _
      $region78: #{rt_infer_forward.1} parent=5 // pred_fallthru
        _
      %p596 = scmp.le.s32.totalorder 2, %s12
      // Predicated region
      $region87: #{rt_infer_forward.1} parent=5 // pred_check
        %p597 = pneg %p596
      $region88: #{rt_infer_forward.1} parent=5 // pred_check_branch
        %599 = sbr.rel (%p597) target = $region90
      $region89: #{rt_infer_forward.1} parent=5 // pred_region
        %s600 = ssub.s32 %s12, 2
        // Predicated region
        $region91: #{rt_infer_forward.1} parent=89 // pred_check
          %p601 = pneg %p172
        $region92: #{rt_infer_forward.1} parent=89 // pred_check_branch
          %603 = sbr.rel (%p601) target = $region94
        $region93: #{rt_infer_forward.1} parent=89 // pred_region
          %p604 = scmp.lt.s32.totalorder %s18, 1
          %s605 = scalar_select %p604, %s18, 1
          %s606 = smul.addr %s605, 2
          %s607 = smul.addr %s606, 8
          %s608 = scalar_lea.vmem %s6, %s607
        $region94: #{rt_infer_forward.1} parent=89 // pred_fallthru
          _
      $region90: #{rt_infer_forward.1} parent=5 // pred_fallthru
        _
    $region6: #{rt_infer_forward.1} parent=1 // loop_footer
      %s16 = sadd.s32 1, %s12
    $region7: #{rt_infer_forward.1} parent=1 // loop_footer_branch
      %11 = sbr.rel target = $region3
    $region8: #{rt_infer_forward.1} parent=1 // loop_exit
      _

</llo_original>
